<compile_context>
chip_gen: v6e
topology: v6e:2x2x1
jax: 0.10.0
libtpu: 0.0.40
codegen_flags: <defaults>
</compile_context>

<pallas_src>
import jax
import jax.numpy as jnp
from jax import lax
from jax.experimental import pallas as pl
from jax.experimental.pallas import tpu as pltpu

EPS = 1e-9
_LANE = 128
_DEFAULT_TARGET_BLOCK_BYTES = 4 * 1024 * 1024
_VMEM_CAP_BYTES = 48 * 1024 * 1024      # headroom on v7x's 64 MiB, plenty on v5e/v6e
_MIN_PARALLEL_STEPS = 4                 # keep v7x's two TensorCores fed


def _round_up(v, m):
    return (v + m - 1) // m * m


def _cdiv(a, b):
    return (a + b - 1) // b


def _vmem_limit(block_in_bytes, block_out_bytes, f32_block_elems):
    # 2x double-buffered in + out blocks, plus headroom for full-block f32 temps.
    need = 2 * (block_in_bytes + block_out_bytes) + 2 * f32_block_elems * 4 + (4 << 20)
    return int(min(max(need, 16 << 20), _VMEM_CAP_BYTES))


def _make_single_pass_kernel(hw, eps):
    """One grid step sees a full (TC, HW) row block: stats + normalize in one shot."""
    inv_n = 1.0 / float(hw)

    def kernel(x_ref, s_ref, o_ref):
        x = x_ref[...].astype(jnp.float32)                      # (TC, HW)
        mean = jnp.sum(x, axis=-1, keepdims=True) * inv_n       # (TC, 1)
        ex2 = jnp.sum(x * x, axis=-1, keepdims=True) * inv_n
        var = jnp.maximum(ex2 - mean * mean, 0.0)               # clamp: f32 cancellation
        inv_std = lax.rsqrt(var + eps)
        s = s_ref[...].astype(jnp.float32)                      # (TC, 1) lane-broadcast
        # additive term is `scale` on purpose (PyTorch quirk reproduced)
        o_ref[...] = ((x - mean) * (inv_std * s) + s).astype(o_ref.dtype)

    return kernel


def _make_two_pass_kernel(hw, hw_blk, n_chunks, eps):
    """Large-HW path: phase 1 (k < n_chunks) accumulates per-channel sum/sumsq,
    phase 2 (k >= n_chunks) re-reads each HW chunk and writes normalized output."""
    inv_n = 1.0 / float(hw)
    tail = (hw % hw_blk) != 0        # last chunk is partial -> mask its stale lanes

    def kernel(x_ref, s_ref, o_ref, sum_ref, sq_ref):
        k = pl.program_id(2)

        @pl.when(k == 0)
        def _():
            sum_ref[...] = jnp.zeros_like(sum_ref)
            sq_ref[...] = jnp.zeros_like(sq_ref)

        @pl.when(k < n_chunks)                 # phase 1: accumulate statistics
        def _():
            x = x_ref[...].astype(jnp.float32)           # (TC, HW_BLK)
            if tail:
                col = lax.broadcasted_iota(jnp.int32, x.shape, 1)
                valid = (k * hw_blk + col) < hw
                x = jnp.where(valid, x, 0.0)
            sum_ref[...] = sum_ref[...] + jnp.sum(x, axis=-1, keepdims=True)
            sq_ref[...] = sq_ref[...] + jnp.sum(x * x, axis=-1, keepdims=True)

        @pl.when(k >= n_chunks)                # phase 2: normalize + store
        def _():
            x = x_ref[...].astype(jnp.float32)
            mean = sum_ref[...] * inv_n
            var = jnp.maximum(sq_ref[...] * inv_n - mean * mean, 0.0)
            inv_std = lax.rsqrt(var + eps)
            s = s_ref[...].astype(jnp.float32)
            o_ref[...] = ((x - mean) * (inv_std * s) + s).astype(o_ref.dtype)

    return kernel


def feat_norm_instance(x, scale, eps=EPS, *, target_block_bytes=_DEFAULT_TARGET_BLOCK_BYTES):
    """FeatNorm(norm_type='instance') forward. x: (B, C, H, W), scale: (C,)."""
    B, C, H, W = x.shape
    HW = H * W
    itemsize = jnp.dtype(x.dtype).itemsize
    sub = {4: 8, 2: 16, 1: 32}.get(itemsize, 8)          # sublane granularity

    # TODO(synk): HW == 1 diverges from PyTorch (unbiased var of a single element
    # is NaN there; here var == 0 so out == scale).

    x_flat = x.reshape(B, C, HW)
    scale_col = scale.reshape(C, 1)                       # (C, 1) -> free lane-broadcast
    row_bytes = HW * itemsize

    if sub * row_bytes <= target_block_bytes:
        # ---- Path A: full HW row(s) resident per grid step (common case) ----
        if C <= sub:
            TC = C                                        # full-dim block, always legal
        else:
            tc = max(sub, (target_block_bytes // row_bytes) // sub * sub)
            TC = min(tc, _round_up(C, sub))
            # guarantee enough parallel grid steps for v7x's two TensorCores
            while B * _cdiv(C, TC) < _MIN_PARALLEL_STEPS and TC > sub:
                TC = max(sub, _round_up(TC // 2, sub))
        grid = (B, _cdiv(C, TC))
        block_bytes = TC * HW * itemsize

        out_flat = pl.pallas_call(
            _make_single_pass_kernel(HW, eps),
            out_shape=jax.ShapeDtypeStruct((B, C, HW), x.dtype),
            grid=grid,
            in_specs=[
                pl.BlockSpec((pl.Squeezed(), TC, HW), lambda b, c: (b, c, 0)),   # x
                pl.BlockSpec((TC, 1), lambda b, c: (c, 0)),                      # scale col
            ],
            out_specs=pl.BlockSpec((pl.Squeezed(), TC, HW), lambda b, c: (b, c, 0)),
            compiler_params=pltpu.CompilerParams(
                dimension_semantics=("parallel", "parallel"),
                vmem_limit_bytes=_vmem_limit(block_bytes, block_bytes, TC * HW),
            ),
        )(x_flat, scale_col)
    else:
        # ---- Path B: one channel-row no longer fits the budget -> chunk HW ----
        TC = C if C <= sub else sub
        HW_BLK = max(_LANE, (target_block_bytes // (TC * itemsize)) // _LANE * _LANE)
        HW_BLK = min(HW_BLK, _round_up(HW, _LANE))
        n_chunks = _cdiv(HW, HW_BLK)
        grid = (B, _cdiv(C, TC), 2 * n_chunks)            # phase 1: stats, phase 2: write
        block_bytes = TC * HW_BLK * itemsize

        out_flat = pl.pallas_call(
            _make_two_pass_kernel(HW, HW_BLK, n_chunks, eps),
            out_shape=jax.ShapeDtypeStruct((B, C, HW), x.dtype),
            grid=grid,
            in_specs=[
                pl.BlockSpec((pl.Squeezed(), TC, HW_BLK),
                             lambda b, c, k: (b, c, k % n_chunks)),               # x
                pl.BlockSpec((TC, 1), lambda b, c, k: (c, 0)),                    # scale col
            ],
            out_specs=pl.BlockSpec((pl.Squeezed(), TC, HW_BLK),
                                   lambda b, c, k: (b, c, jnp.maximum(k - n_chunks, 0))),
            scratch_shapes=[
                pltpu.VMEM((TC, 1), jnp.float32),          # per-channel running sum
                pltpu.VMEM((TC, 1), jnp.float32),          # per-channel running sum of squares
            ],
            compiler_params=pltpu.CompilerParams(
                dimension_semantics=("parallel", "parallel", "arbitrary"),
                vmem_limit_bytes=_vmem_limit(block_bytes, block_bytes, TC * HW_BLK),
            ),
        )(x_flat, scale_col)

    return out_flat.reshape(B, C, H, W)


def _reference(x, scale, eps=EPS):
    mean = jnp.mean(x, axis=(2, 3), keepdims=True)
    var = jnp.mean((x - mean) ** 2, axis=(2, 3), keepdims=True)
    s = scale.reshape(1, -1, 1, 1)
    return (x - mean) / jnp.sqrt(var + eps) * s + s


if __name__ == "__main__":
    key = jax.random.PRNGKey(0)

    def check(shape, *, target_block_bytes=_DEFAULT_TARGET_BLOCK_BYTES, seed_offset=0):
        kx, ks = jax.random.split(jax.random.fold_in(key, seed_offset))
        B, C, H, W = shape
        x = jax.random.normal(kx, shape, dtype=jnp.float32)
        # InsNorm._reset_parameters: scale.uniform_() in [0,1); shift zeroed (unused)
        scale = jax.random.uniform(ks, (C,), dtype=jnp.float32)
        out = feat_norm_instance(x, scale, target_block_bytes=target_block_bytes)
        jax.block_until_ready(out)
        ref = _reference(x, scale)
        assert jnp.allclose(out, ref, atol=1e-4, rtol=1e-4), f"mismatch vs reference for {shape}"

    # main case
    check((2, 4, 16, 16))
    # unaligned HW (49 lanes) and C smaller than the sublane granularity
    check((1, 3, 7, 7), seed_offset=1)
    # partial channel tiles (C not a multiple of the channel tile), unaligned HW
    check((1, 20, 9, 11), seed_offset=2)
    # force the large-HW chunked (two-phase) path with a tiny block budget
    check((1, 3, 40, 40), target_block_bytes=8 * 1024, seed_offset=3)

    print("KERNEL_OK")
</pallas_src>

<mosaic_0001>
module attributes {stable_mosaic.version = 11 : i64} {
  func.func @kernel(%arg0: i32, %arg1: i32, %arg2: memref<1x4x256xf32, #tpu.memory_space<vmem>>, %arg3: memref<4x1xf32, #tpu.memory_space<vmem>>, %arg4: memref<1x4x256xf32, #tpu.memory_space<vmem>>) attributes {dimension_semantics = [#tpu.dimension_semantics<parallel>, #tpu.dimension_semantics<parallel>], iteration_bounds = array<i64: 2, 1>, scalar_prefetch = 0 : i64, scratch_operands = 0 : i64, tpu.core_type = #tpu.core_type<tc>, window_params = [{transform_indices = @transform_0, window_bounds = array<i64: 1, 4, 256>}, {transform_indices = @transform_1, window_bounds = array<i64: 4, 1>}, {transform_indices = @transform_2, window_bounds = array<i64: 1, 4, 256>}]} {
    %c0 = arith.constant 0 : index
    %c0_0 = arith.constant 0 : index
    %c0_1 = arith.constant 0 : index
    %0 = vector.load %arg2[%c0, %c0_0, %c0_1] : memref<1x4x256xf32, #tpu.memory_space<vmem>>, vector<1x4x256xf32>
    %1 = vector.shape_cast %0 : vector<1x4x256xf32> to vector<4x256xf32>
    %cst = arith.constant dense<0.000000e+00> : vector<4xf32>
    %2 = vector.multi_reduction <add>, %1, %cst [1] : vector<4x256xf32> to vector<4xf32>
    %3 = vector.shape_cast %2 : vector<4xf32> to vector<4x1xf32>
    %cst_2 = arith.constant 3.906250e-03 : f32
    %4 = vector.broadcast %cst_2 : f32 to vector<4x1xf32>
    %5 = arith.mulf %3, %4 : vector<4x1xf32>
    %6 = arith.mulf %1, %1 : vector<4x256xf32>
    %cst_3 = arith.constant dense<0.000000e+00> : vector<4xf32>
    %7 = vector.multi_reduction <add>, %6, %cst_3 [1] : vector<4x256xf32> to vector<4xf32>
    %8 = vector.shape_cast %7 : vector<4xf32> to vector<4x1xf32>
    %cst_4 = arith.constant 3.906250e-03 : f32
    %9 = vector.broadcast %cst_4 : f32 to vector<4x1xf32>
    %10 = arith.mulf %8, %9 : vector<4x1xf32>
    %11 = arith.mulf %5, %5 : vector<4x1xf32>
    %12 = arith.subf %10, %11 : vector<4x1xf32>
    %cst_5 = arith.constant 0.000000e+00 : f32
    %13 = vector.broadcast %cst_5 : f32 to vector<4x1xf32>
    %14 = arith.maximumf %12, %13 : vector<4x1xf32>
    %cst_6 = arith.constant 9.99999971E-10 : f32
    %15 = vector.broadcast %cst_6 : f32 to vector<4x1xf32>
    %16 = arith.addf %14, %15 : vector<4x1xf32>
    %17 = math.rsqrt %16 : vector<4x1xf32>
    %c0_7 = arith.constant 0 : index
    %c0_8 = arith.constant 0 : index
    %18 = vector.load %arg3[%c0_7, %c0_8] : memref<4x1xf32, #tpu.memory_space<vmem>>, vector<4x1xf32>
    %19 = vector.broadcast %5 : vector<4x1xf32> to vector<4x256xf32>
    %20 = arith.subf %1, %19 : vector<4x256xf32>
    %21 = arith.mulf %17, %18 : vector<4x1xf32>
    %22 = vector.broadcast %21 : vector<4x1xf32> to vector<4x256xf32>
    %23 = arith.mulf %20, %22 : vector<4x256xf32>
    %24 = vector.broadcast %18 : vector<4x1xf32> to vector<4x256xf32>
    %25 = arith.addf %23, %24 : vector<4x256xf32>
    %c0_9 = arith.constant 0 : index
    %c0_10 = arith.constant 0 : index
    %c0_11 = arith.constant 0 : index
    %26 = vector.load %arg4[%c0_9, %c0_10, %c0_11] : memref<1x4x256xf32, #tpu.memory_space<vmem>>, vector<1x4x256xf32>
    %27 = vector.shape_cast %26 : vector<1x4x256xf32> to vector<4x256xf32>
    %28 = vector.shape_cast %25 : vector<4x256xf32> to vector<1x4x256xf32>
    tpu.vector_store %arg4[%c0_9, %c0_10, %c0_11], %28 {strides = array<i32>} : memref<1x4x256xf32, #tpu.memory_space<vmem>>, vector<1x4x256xf32>,
    return
  }
  func.func @transform_0(%arg0: i32, %arg1: i32) -> (i32, i32, i32) {
    %c0_i32 = arith.constant 0 : i32
    %c0_i32_0 = arith.constant 0 : i32
    return %arg0, %arg1, %c0_i32 : i32, i32, i32
  }
  func.func @transform_1(%arg0: i32, %arg1: i32) -> (i32, i32) {
    %c0_i32 = arith.constant 0 : i32
    %c0_i32_0 = arith.constant 0 : i32
    return %arg1, %c0_i32 : i32, i32
  }
  func.func @transform_2(%arg0: i32, %arg1: i32) -> (i32, i32, i32) {
    %c0_i32 = arith.constant 0 : i32
    %c0_i32_0 = arith.constant 0 : i32
    return %arg0, %arg1, %c0_i32 : i32, i32, i32
  }
}

</mosaic_0001>

<llo_original>
// kernel: tpu_custom_call.1
$region0: #{tpu_custom_call.1}
  #allocation0 [shape = 'u32[]', space=smem, size = 0x4, offset = 0x4, fixed_abs, tag = 'smem constant byte address 0x4 - core index']
  #allocation1 [shape = 'u32[144,128]{1,0:T(1,128)}', space=vmem, size = 0x12000, scoped, tag = 'internal scratch']
  %s0 = inlined_call_operand.hbm [shape: f32[2,4,256], index: 0, kind: input, shape index: {}]
  %s1 = inlined_call_operand.vmem [shape: f32[4,1], index: 1, kind: input, shape index: {}]
  %s2 = inlined_call_operand.hbm [shape: f32[2,4,256], index: 2, kind: output, shape index: {}]
  %s3 = sld [smem:[#allocation0]]
  $region45: #{tpu_custom_call.1} parent=0
    _
  %s5 = ssub.s32 1, %s3
  %s6 = scalar_select 0, %s5, %s3
  $region1: #{tpu_custom_call.1} parent=0
    #allocation2 [shape = 'u8[8192]{0}', space=vmem, size = 0x2000, scoped, tag = 'input window, operand 0']
    #allocation3 [shape = 's32[2]{0}', space=sflag, size = 0x8, scoped, tag = 'scoped memory for tpu_custom_call.1']
    #allocation4 [shape = 's32[2]{0}', space=sflag, size = 0x8, scoped, tag = 'scoped memory for tpu_custom_call.1']
    #allocation5 [shape = 'u8[8192]{0}', space=vmem, size = 0x2000, scoped, tag = 'output window, operand 0']
    %7 = vsyncpa [#allocation3], 0
    %s8 = scalar_lea.sflag [#allocation3], 1
    %9 = vsyncpa %s8, 0
    %10 = vsyncpa [#allocation4], 0
    %s11 = scalar_lea.sflag [#allocation4], 1
    %12 = vsyncpa %s11, 0
    loop: start=0, step=1, limit=4
    $region2: #{tpu_custom_call.1} parent=1 // loop_pre_header
      _
    $region3: #{tpu_custom_call.1} parent=1 // loop_header
      %s14 = sphi 0, %s18
      %p15 = scmp.ge.s32.totalorder %s14, 4
      %s21 = sphi 0, %s33
      %s22 = sphi 0, %s29
      %s23 = sphi 0, %s21
      %s24 = sphi 0, %s22
      %s25 = sphi 0, %s23
      %s26 = sphi 0, %s24
      %s38 = sphi 0, %s40
      %s41 = sphi 0, %s38
      %s42 = sphi 0, %s41
      %s58 = sphi 0, %s42
      %s64 = sphi 0, %s66
      %s67 = sphi 0, %s64
      %s68 = sphi 0, %s67
      %s84 = sphi 0, %s68
      %s92 = sphi 0, %s94
      %s95 = sphi 0, %s92
      %s96 = sphi 0, %s95
      %s112 = sphi 0, %s96
    $region4: #{tpu_custom_call.1} parent=1 // loop_header_branch
      %17 = sbr.rel (%p15) target = $region8
    $region5: #{tpu_custom_call.1} parent=1 // loop_body
      %s19 = ssub.s32 %s14, 1
      %s20 = ssub.s32 %s14, 2
      %s27 = sadd.s32 1, %s22
      %p28 = scmp.ge.s32.totalorder %s27, 1
      %s29 = scalar_select %p28, 0, %s27
      %s30 = sadd.s32 1, %s21
      %s31 = scalar_select %p28, %s30, %s21
      %p32 = scmp.ge.s32.totalorder %s31, 2
      %s33 = scalar_select %p32, 0, %s31
      %s34 = ssub.s32 %s21, %s33
      %s35 = ssub.s32 %s22, %s29
      %s36 = sor.u32 %s34, %s35
      %p37 = scmp.eq.s32.totalorder %s36, 0
      %s39 = sadd.s32 %s38, 1
      %s40 = scalar_select %p37, %s38, %s39
      %p43 = pneg %p37
      %p44 = scmp.eq.s32.totalorder %s14, 1
      %p45 = por %p43, %p44
      %p46 = scmp.ne.s32.totalorder %s38, %s41
      %p47 = scmp.eq.s32.totalorder %s14, 0
      %p48 = por %p46, %p47
      %p49 = scmp.ne.s32.totalorder %s38, %s41
      %p50 = scmp.eq.s32.totalorder %s19, 1
      %p51 = por %p49, %p50
      %p52 = scmp.ne.s32.totalorder %s41, %s42
      %p53 = scmp.eq.s32.totalorder %s19, 0
      %p54 = por %p52, %p53
      %p55 = scmp.ne.s32.totalorder %s41, %s42
      %p56 = scmp.eq.s32.totalorder %s20, 1
      %p57 = por %p55, %p56
      %p59 = scmp.ne.s32.totalorder %s42, %s58
      %p60 = scmp.eq.s32.totalorder %s20, 0
      %p61 = por %p59, %p60
      %s62 = ssub.s32 %s22, %s29
      %p63 = scmp.eq.s32.totalorder %s62, 0
      %s65 = sadd.s32 %s64, 1
      %s66 = scalar_select %p63, %s64, %s65
      %p69 = pneg %p63
      %p70 = scmp.eq.s32.totalorder %s14, 1
      %p71 = por %p69, %p70
      %p72 = scmp.ne.s32.totalorder %s64, %s67
      %p73 = scmp.eq.s32.totalorder %s14, 0
      %p74 = por %p72, %p73
      %p75 = scmp.ne.s32.totalorder %s64, %s67
      %p76 = scmp.eq.s32.totalorder %s19, 1
      %p77 = por %p75, %p76
      %p78 = scmp.ne.s32.totalorder %s67, %s68
      %p79 = scmp.eq.s32.totalorder %s19, 0
      %p80 = por %p78, %p79
      %p81 = scmp.ne.s32.totalorder %s67, %s68
      %p82 = scmp.eq.s32.totalorder %s20, 1
      %p83 = por %p81, %p82
      %p85 = scmp.ne.s32.totalorder %s68, %s84
      %p86 = scmp.eq.s32.totalorder %s20, 0
      %p87 = por %p85, %p86
      %s88 = ssub.s32 %s21, %s33
      %s89 = ssub.s32 %s22, %s29
      %s90 = sor.u32 %s88, %s89
      %p91 = scmp.eq.s32.totalorder %s90, 0
      %s93 = sadd.s32 %s92, 1
      %s94 = scalar_select %p91, %s92, %s93
      %p97 = pneg %p91
      %p98 = scmp.eq.s32.totalorder %s14, 1
      %p99 = por %p97, %p98
      %p100 = scmp.ne.s32.totalorder %s92, %s95
      %p101 = scmp.eq.s32.totalorder %s14, 0
      %p102 = por %p100, %p101
      %p103 = scmp.ne.s32.totalorder %s92, %s95
      %p104 = scmp.eq.s32.totalorder %s19, 1
      %p105 = por %p103, %p104
      %p106 = scmp.ne.s32.totalorder %s95, %s96
      %p107 = scmp.eq.s32.totalorder %s19, 0
      %p108 = por %p106, %p107
      %p109 = scmp.ne.s32.totalorder %s95, %s96
      %p110 = scmp.eq.s32.totalorder %s20, 1
      %p111 = por %p109, %p110
      %p113 = scmp.ne.s32.totalorder %s96, %s112
      %p114 = scmp.eq.s32.totalorder %s20, 0
      %p115 = por %p113, %p114
      %p116 = scmp.le.s32.totalorder 1, %s14
      %p117 = scmp.lt.s32.totalorder %s14, 3
      %p118 = pnand %p116, %p117
      %p119 = pneg %p118
      // Predicated region
      $region9: #{tpu_custom_call.1} parent=5 // pred_check
        _
      $region10: #{tpu_custom_call.1} parent=5 // pred_check_branch
        %121 = sbr.rel (%p118) target = $region12
      $region11: #{tpu_custom_call.1} parent=5 // pred_region
        %s122 = ssub.s32 %s14, 1
        // Predicated region
        $region13: #{tpu_custom_call.1} parent=11 // pred_check
          %p123 = pneg %p80
        $region14: #{tpu_custom_call.1} parent=11 // pred_check_branch
          %125 = sbr.rel (%p123) target = $region16
        $region15: #{tpu_custom_call.1} parent=11 // pred_region
          %p126 = scmp.lt.s32.totalorder %s24, 0
          %s127 = scalar_select %p126, %s24, 0
          %s128 = smul.addr %s127, 4
          %s129 = scalar_lea.vmem %s1, %s128
        $region16: #{tpu_custom_call.1} parent=11 // pred_fallthru
          _
      $region12: #{tpu_custom_call.1} parent=5 // pred_fallthru
        _
      %p130 = scmp.lt.s32.totalorder %s14, 2
      // Predicated region
      $region17: #{tpu_custom_call.1} parent=5 // pred_check
        %p131 = pneg %p130
      $region18: #{tpu_custom_call.1} parent=5 // pred_check_branch
        %133 = sbr.rel (%p131) target = $region20
      $region19: #{tpu_custom_call.1} parent=5 // pred_region
        // Predicated region
        $region21: #{tpu_custom_call.1} parent=19 // pred_check
          %p134 = pneg %p48
        $region22: #{tpu_custom_call.1} parent=19 // pred_check_branch
          %136 = sbr.rel (%p134) target = $region24
        $region23: #{tpu_custom_call.1} parent=19 // pred_region
          %s137 = sand.u32 %s38, 1
          %s138 = scalar_lea.sflag [#allocation3], %s137
          %s139 = sand.u32 %s38, 1
          %s140 = smul.addr %s139, 8
          %s141 = scalar_lea.vmem [#allocation2], %s140
          %s143 = ssub.s32 128, 128
          %144 = vsyncadd %s138, %s143
          %s145 = smul.addr %s22, 2
          %s146 = smul.addr %s21, 2
          %s147 = sadd.s32 %s145, %s146
          %s148 = smul.addr %s147, 64
          %s149 = scalar_lea.hbm %s0, %s148
          %s151 = sshll.u32 %s141, 4
          %s152 = int_to_ptr.vmem [resolvable:$true] %s151
          %154 = dma.hbm_to_vmem [thread:$0]  %s149, 128, %s152, %s138
        $region24: #{tpu_custom_call.1} parent=19 // pred_fallthru
          _
      $region20: #{tpu_custom_call.1} parent=5 // pred_fallthru
        _
      %p155 = scmp.le.s32.totalorder 1, %s14
      %p156 = scmp.lt.s32.totalorder %s14, 3
      %p157 = pnand %p155, %p156
      %p158 = pneg %p157
      // Predicated region
      $region25: #{tpu_custom_call.1} parent=5 // pred_check
        _
      $region26: #{tpu_custom_call.1} parent=5 // pred_check_branch
        %160 = sbr.rel (%p157) target = $region28
      $region27: #{tpu_custom_call.1} parent=5 // pred_region
        %s161 = ssub.s32 %s14, 1
        %s162 = sand.u32 %s41, 1
        %s163 = scalar_lea.sflag [#allocation3], %s162
        %s164 = sand.u32 %s41, 1
        %s165 = smul.addr %s164, 8
        %s166 = scalar_lea.vmem [#allocation2], %s165
        // Predicated region
        $region29: #{tpu_custom_call.1} parent=27 // pred_check
          %p167 = pneg %p54
        $region30: #{tpu_custom_call.1} parent=27 // pred_check_branch
          %169 = sbr.rel (%p167) target = $region32
        $region31: #{tpu_custom_call.1} parent=27 // pred_region
          %170 = dma.done %s163, 128
        $region32: #{tpu_custom_call.1} parent=27 // pred_fallthru
          _
        %s171 = sand.u32 %s41, 1
        %s172 = scalar_lea.sflag [#allocation3], %s171
        %s173 = sand.u32 %s41, 1
        %s174 = smul.addr %s173, 8
        %s175 = scalar_lea.vmem [#allocation2], %s174
        %p176 = pneg %p54
        %p177 = pneg %p51
        %p178 = scmp.lt.s32.totalorder %s24, 0
        %s179 = scalar_select %p178, %s24, 0
        %s180 = smul.addr %s179, 4
        %s181 = scalar_lea.vmem %s1, %s180
        %p182 = pneg %p80
        %p183 = pneg %p77
        %p184 = pneg %p108
        %p185 = pneg %p105
        %s186 = sand.u32 %s95, 1
        %s187 = scalar_lea.sflag [#allocation4], %s186
        %s188 = sand.u32 %s95, 1
        %s189 = smul.addr %s188, 8
        %s190 = scalar_lea.vmem [#allocation5], %s189
        %p191 = scmp.lt.s32.totalorder %s24, 0
        %s192 = scalar_select %p191, %s24, 0
        %s193 = smul.addr %s192, 4
        %s194 = scalar_lea.vmem %s1, %s193
        %v195 = vld [vmem:[%s166] sm:$0xff]
        %v197 = vcombine.high %v195, %v195
        %vm199 = vcmask 1043456
        %v200 = vsel %vm199, %v195, 0.0
        %v201 = vsel %vm199, %v197, 0.0
        %v202 = vadd.f32 %v200, %v201
        %203 = vadd.xlane.f32.xlu0 %v202
        %v204 = vpop.xlane.xlu0 %203
        %v205 = vmul.f32 %v204, 0.00390625
        %v206 = vmul.f32 %v195, %v195
        %v208 = vcombine.high %v206, %v206
        %v210 = vsel %vm199, %v206, 0.0
        %v211 = vsel %vm199, %v208, 0.0
        %v212 = vadd.f32 %v210, %v211
        %213 = vadd.xlane.f32.xlu0 %v212
        %v214 = vpop.xlane.xlu0 %213
        %v215 = vmul.f32 %v214, 0.00390625
        %v216 = vmul.f32 %v205, %v205
        %v217 = vsub.f32 %v215, %v216
        %v218 = vmax.f32 %v217, 0.0
        %v219 = vadd.f32 %v218, 1e-09
        %v220 = vrsqrt.pop %v219
        %v221 = vld [vmem:[%s194] sm:$0xf]
        %v224 = vunpack.c.l.s4 839922192
        %v225 = vunpack.c.0.s8 %v224
        %v226 = vlaneseq
        %v227 = vshrl.u32 %v226, 7
        %v228 = vsub.s32 %v225, %v227
        %v229 = vrot.slane %v205, %v228
        %v231 = vsub.f32 %v195, %v229
        %v232 = vmul.f32 %v220, %v221
        %234 = vset.pattern.permute.xlu0 0
        %235 = vperm.xlu0 %234, %v232
        %v236 = vpop.permute.xlu0 %235
        %v238 = vunpack.c.l.s4 839922192
        %v239 = vunpack.c.0.s8 %v238
        %v240 = vlaneseq
        %v241 = vshrl.u32 %v240, 7
        %v242 = vsub.s32 %v239, %v241
        %v243 = vrot.slane %v236, %v242
        %v245 = vmul.f32 %v231, %v243
        %247 = vset.pattern.permute.xlu0 0
        %248 = vperm.xlu0 %247, %v221
        %v249 = vpop.permute.xlu0 %248
        %v251 = vunpack.c.l.s4 839922192
        %v252 = vunpack.c.0.s8 %v251
        %v253 = vlaneseq
        %v254 = vshrl.u32 %v253, 7
        %v255 = vsub.s32 %v252, %v254
        %v256 = vrot.slane %v249, %v255
        %v258 = vadd.f32 %v245, %v256
        %259 = vst [vmem:[%s190] sm:$0xff] %v258
        %s260 = sand.u32 %s95, 1
        %s261 = scalar_lea.sflag [#allocation4], %s260
        %s262 = sand.u32 %s95, 1
        %s263 = smul.addr %s262, 8
        %s264 = scalar_lea.vmem [#allocation5], %s263
        // Predicated region
        $region33: #{tpu_custom_call.1} parent=27 // pred_check
          %p265 = pneg %p105
        $region34: #{tpu_custom_call.1} parent=27 // pred_check_branch
          %267 = sbr.rel (%p265) target = $region36
        $region35: #{tpu_custom_call.1} parent=27 // pred_region
          %s269 = ssub.s32 128, 128
          %270 = vsyncadd %s261, %s269
          %s271 = smul.addr %s24, 2
          %s272 = smul.addr %s23, 2
          %s273 = sadd.s32 %s271, %s272
          %s274 = smul.addr %s273, 64
          %s275 = scalar_lea.hbm %s2, %s274
          %s277 = sshll.u32 %s264, 4
          %s278 = int_to_ptr.vmem [resolvable:$true] %s277
          %280 = dma.vmem_to_hbm [thread:$0]  %s278, 128, %s275, %s261
        $region36: #{tpu_custom_call.1} parent=27 // pred_fallthru
          _
      $region28: #{tpu_custom_call.1} parent=5 // pred_fallthru
        _
      %p281 = scmp.le.s32.totalorder 2, %s14
      // Predicated region
      $region37: #{tpu_custom_call.1} parent=5 // pred_check
        %p282 = pneg %p281
      $region38: #{tpu_custom_call.1} parent=5 // pred_check_branch
        %284 = sbr.rel (%p282) target = $region40
      $region39: #{tpu_custom_call.1} parent=5 // pred_region
        %s285 = ssub.s32 %s14, 2
        // Predicated region
        $region41: #{tpu_custom_call.1} parent=39 // pred_check
          %p286 = pneg %p111
        $region42: #{tpu_custom_call.1} parent=39 // pred_check_branch
          %288 = sbr.rel (%p286) target = $region44
        $region43: #{tpu_custom_call.1} parent=39 // pred_region
          %s289 = sand.u32 %s96, 1
          %s290 = scalar_lea.sflag [#allocation4], %s289
          %s291 = sand.u32 %s96, 1
          %s292 = smul.addr %s291, 8
          %s293 = scalar_lea.vmem [#allocation5], %s292
          %294 = dma.done %s290, 128
        $region44: #{tpu_custom_call.1} parent=39 // pred_fallthru
          _
      $region40: #{tpu_custom_call.1} parent=5 // pred_fallthru
        _
    $region6: #{tpu_custom_call.1} parent=1 // loop_footer
      %s18 = sadd.s32 1, %s14
    $region7: #{tpu_custom_call.1} parent=1 // loop_footer_branch
      %13 = sbr.rel target = $region3
    $region8: #{tpu_custom_call.1} parent=1 // loop_exit
      _
    %295 = vsyncpa [#allocation3], 1
    %s296 = scalar_lea.sflag [#allocation3], 1
    %297 = vsyncpa %s296, 1
    %298 = vsyncpa [#allocation4], 1
    %s299 = scalar_lea.sflag [#allocation4], 1
    %300 = vsyncpa %s299, 1

</llo_original>
